<compile_context>
chip_gen: v7x
topology: tpu7x:2x2x1
jax: 0.10.0
libtpu: 0.0.40
codegen_flags: <defaults>
</compile_context>

<pallas_src>
import functools

import numpy as np
import jax
import jax.numpy as jnp
from jax.experimental import pallas as pl
from jax.experimental.pallas import tpu as pltpu

BN_EPS = 1e-5


def _round_up(x, m):
    return (x + m - 1) // m * m


def _fused_cnn_block_kernel(x_ref, w_ref, b_ref, g_ref, beta_ref, mask_ref,
                            conv_ref, act_ref, init_ref, *,
                            num_layers, K, pad, N, Cin0, Cout, Cmax, L, Lp, LANE):
    """All CNNBlock layers in one invocation.

    x_ref    : (N, Cin0, L)            raw input (PyTorch NCL layout)
    w_ref    : (num_layers, Cout, K*Cmax)  im2col-ordered weights (row = k*Cmax + c)
    b_ref    : (num_layers, Cout, 1)   conv bias
    g_ref    : (num_layers, Cout, 1)   BN gamma
    beta_ref : (num_layers, Cout, 1)   BN beta
    mask_ref : (1, LANE)               1.0 on valid output lanes, 0.0 on halo/pad lanes
    conv_ref : (num_layers, Cout, LANE) per-layer pre-BN conv output (lane-dense slab)
    act_ref  : (Cout, LANE)            final post-ReLU activation (lane-dense slab)
    init_ref : VMEM (Cmax, LANE)       scratch used to lay the input out lane-densely
    """
    # ---- lay the input out as a flat lane-dense slab; halos / pad lanes are zero ----
    init_ref[...] = jnp.zeros_like(init_ref)
    for n in range(N):
        off = n * Lp + pad
        init_ref[0:Cin0, off:off + L] = x_ref[n]
    cur = init_ref[...]                                  # (Cmax, LANE)

    mask = mask_ref[...]                                 # (1, LANE)
    inv_count = 1.0 / float(N * L)

    for l in range(num_layers):
        # im2col: stack K shifted views along the sublane axis -> (K*Cmax, LANE).
        # Roll is circular; wrapped lanes only land on masked output positions.
        cols = jnp.concatenate(
            [pltpu.roll(cur, (pad - k) % LANE, 1) for k in range(K)], axis=0)

        # One MXU matmul per layer: (Cout, K*Cmax) @ (K*Cmax, LANE), batch folded in lanes.
        y = jnp.dot(w_ref[l], cols, preferred_element_type=jnp.float32) + b_ref[l]
        conv_ref[l] = y                                  # pre-BN conv output slab

        # BatchNorm1d, training mode: batch stats over (N, L), biased variance.
        # Stats computed from the in-register y, masked to valid lanes.
        mean = jnp.sum(y * mask, axis=1, keepdims=True) * inv_count        # (Cout, 1)
        cen = (y - mean) * mask
        var = jnp.sum(cen * cen, axis=1, keepdims=True) * inv_count        # (Cout, 1)
        yhat = (y - mean) * jax.lax.rsqrt(var + BN_EPS)
        a = jnp.maximum(g_ref[l] * yhat + beta_ref[l], 0.0) * mask         # ReLU; halos -> 0

        if Cout < Cmax:  # keep channel slab size uniform across layers
            a = jnp.concatenate(
                [a, jnp.zeros((Cmax - Cout, LANE), jnp.float32)], axis=0)
        cur = a

    act_ref[...] = cur[0:Cout, :]


def prepare_params(params, in_channels, out_channels, kernel_size):
    """One-time parameter prep: pad Cin to Cmax and fold the im2col reordering
    ((Cout, Cin, K) -> (Cout, K*Cmax)) out of the hot path."""
    Cmax = max(in_channels, out_channels)
    K = kernel_size
    w_all, b_all, g_all, beta_all = [], [], [], []
    for (w, b, gamma, beta) in params:
        cin = w.shape[1]
        wp = jnp.zeros((out_channels, Cmax, K), jnp.float32).at[:, :cin, :].set(w)
        w2 = jnp.transpose(wp, (0, 2, 1)).reshape(out_channels, K * Cmax)  # row = k*Cmax + c
        w_all.append(w2)
        b_all.append(b.reshape(out_channels, 1))
        g_all.append(gamma.reshape(out_channels, 1))
        beta_all.append(beta.reshape(out_channels, 1))
    return (jnp.stack(w_all), jnp.stack(b_all), jnp.stack(g_all), jnp.stack(beta_all))


@functools.partial(jax.jit, static_argnums=(2, 3, 4))
def cnn_block_forward(x, prepped, kernel_size, in_channels, out_channels):
    """Mirrors CNNBlock.forward: returns (final_activation, [per-layer conv outputs])."""
    N, Cin0, L = x.shape
    w_all, b_all, g_all, beta_all = prepped
    num_layers = w_all.shape[0]
    Cout = out_channels
    Cmax = max(in_channels, out_channels)
    K = kernel_size
    assert K % 2 == 1, "kernel_size must be odd ('same' padding)"
    pad = K // 2
    Lp = L + 2 * pad                       # per-batch segment width (includes halo)
    LANE = _round_up(N * Lp, 128)          # lane-dense slab width (multiple of 128)

    # Static valid-lane mask: 1.0 where a real (n, j) output position lives.
    mask_np = np.zeros((1, LANE), np.float32)
    for n in range(N):
        mask_np[0, n * Lp + pad:n * Lp + pad + L] = 1.0
    mask_arr = jnp.asarray(mask_np)

    kernel = functools.partial(
        _fused_cnn_block_kernel,
        num_layers=int(num_layers), K=K, pad=pad, N=N, Cin0=Cin0,
        Cout=Cout, Cmax=Cmax, L=L, Lp=Lp, LANE=LANE)

    conv_slab, act_slab = pl.pallas_call(
        kernel,
        out_shape=(
            jax.ShapeDtypeStruct((num_layers, Cout, LANE), jnp.float32),
            jax.ShapeDtypeStruct((Cout, LANE), jnp.float32),
        ),
        grid=(1,),
        in_specs=[
            pl.BlockSpec((N, Cin0, L), lambda i: (0, 0, 0)),
            pl.BlockSpec((num_layers, Cout, K * Cmax), lambda i: (0, 0, 0)),
            pl.BlockSpec((num_layers, Cout, 1), lambda i: (0, 0, 0)),
            pl.BlockSpec((num_layers, Cout, 1), lambda i: (0, 0, 0)),
            pl.BlockSpec((num_layers, Cout, 1), lambda i: (0, 0, 0)),
            pl.BlockSpec((1, LANE), lambda i: (0, 0)),
        ],
        out_specs=(
            pl.BlockSpec((num_layers, Cout, LANE), lambda i: (0, 0, 0)),
            pl.BlockSpec((Cout, LANE), lambda i: (0, 0)),
        ),
        scratch_shapes=[pltpu.VMEM((Cmax, LANE), jnp.float32)],
        compiler_params=pltpu.CompilerParams(
            dimension_semantics=("arbitrary",)),
    )(x, w_all, b_all, g_all, beta_all, mask_arr)

    # Wrapper-side layout plumbing back to PyTorch (N, Cout, L) views.
    valid = N * Lp
    conv_nl = conv_slab[:, :, :valid].reshape(num_layers, Cout, N, Lp)[:, :, :, pad:pad + L]
    conv_outs = [jnp.transpose(conv_nl[l], (1, 0, 2)) for l in range(num_layers)]
    final = jnp.transpose(
        act_slab[:, :valid].reshape(Cout, N, Lp)[:, :, pad:pad + L], (1, 0, 2))
    return final, conv_outs


# ---------------- pure-JAX reference (for correctness check) ----------------
def _ref_forward(x, params, kernel_size):
    pad = kernel_size // 2
    outputs = []
    for (w, b, gamma, beta) in params:
        y = jax.lax.conv_general_dilated(
            x, w, window_strides=(1,), padding=[(pad, pad)],
            dimension_numbers=("NCH", "OIH", "NCH"),
        ) + b[None, :, None]
        outputs.append(y)
        mean = jnp.mean(y, axis=(0, 2), keepdims=True)
        var = jnp.mean((y - mean) ** 2, axis=(0, 2), keepdims=True)
        yhat = (y - mean) / jnp.sqrt(var + BN_EPS)
        x = jnp.maximum(gamma[None, :, None] * yhat + beta[None, :, None], 0.0)
    return x, outputs


if __name__ == "__main__":
    # Config: CNNBlock(in_channels=4, out_channels=8, kernel_size=3, num_layers=2)
    in_channels, out_channels, kernel_size, num_layers = 4, 8, 3, 2
    batch, seq = 2, 16

    key = jax.random.PRNGKey(0)
    params = []
    for i in range(num_layers):
        cin = in_channels if i == 0 else out_channels
        key, kw, kb = jax.random.split(key, 3)
        w = 0.1 * jax.random.normal(kw, (out_channels, cin, kernel_size), jnp.float32)
        b = 0.1 * jax.random.normal(kb, (out_channels,), jnp.float32)
        gamma = jnp.ones((out_channels,), jnp.float32)   # BatchNorm1d default init
        beta = jnp.zeros((out_channels,), jnp.float32)
        params.append((w, b, gamma, beta))

    key, kx = jax.random.split(key)
    x = jax.random.normal(kx, (batch, in_channels, seq), jnp.float32)

    prepped = prepare_params(params, in_channels, out_channels, kernel_size)
    final, conv_outs = cnn_block_forward(x, prepped, kernel_size, in_channels, out_channels)
    final = jax.block_until_ready(final)
    conv_outs = [jax.block_until_ready(o) for o in conv_outs]

    ref_final, ref_outputs = _ref_forward(x, params, kernel_size)
    assert jnp.allclose(final, ref_final, atol=1e-4, rtol=1e-4)
    for o, ro in zip(conv_outs, ref_outputs):
        assert jnp.allclose(o, ro, atol=1e-4, rtol=1e-4)

    print("KERNEL_OK")
</pallas_src>

<mosaic_0001>
module attributes {stable_mosaic.version = 11 : i64} {
  func.func @_fused_cnn_block_kernel(%arg0: i32, %arg1: memref<2x4x16xf32, #tpu.memory_space<vmem>>, %arg2: memref<2x8x24xf32, #tpu.memory_space<vmem>>, %arg3: memref<2x8x1xf32, #tpu.memory_space<vmem>>, %arg4: memref<2x8x1xf32, #tpu.memory_space<vmem>>, %arg5: memref<2x8x1xf32, #tpu.memory_space<vmem>>, %arg6: memref<1x128xf32, #tpu.memory_space<vmem>>, %arg7: memref<2x8x128xf32, #tpu.memory_space<vmem>>, %arg8: memref<8x128xf32, #tpu.memory_space<vmem>>, %arg9: memref<8x128xf32, #tpu.memory_space<vmem>>) attributes {dimension_semantics = [#tpu.dimension_semantics<arbitrary>], iteration_bounds = array<i64: 1>, scalar_prefetch = 0 : i64, scratch_operands = 1 : i64, tpu.core_type = #tpu.core_type<tc>, window_params = [{pipeline_mode = #tpu.pipeline_mode<synchronous>, transform_indices = @transform_0, window_bounds = array<i64: 2, 4, 16>}, {pipeline_mode = #tpu.pipeline_mode<synchronous>, transform_indices = @transform_1, window_bounds = array<i64: 2, 8, 24>}, {pipeline_mode = #tpu.pipeline_mode<synchronous>, transform_indices = @transform_2, window_bounds = array<i64: 2, 8, 1>}, {pipeline_mode = #tpu.pipeline_mode<synchronous>, transform_indices = @transform_3, window_bounds = array<i64: 2, 8, 1>}, {pipeline_mode = #tpu.pipeline_mode<synchronous>, transform_indices = @transform_4, window_bounds = array<i64: 2, 8, 1>}, {pipeline_mode = #tpu.pipeline_mode<synchronous>, transform_indices = @transform_5, window_bounds = array<i64: 1, 128>}, {pipeline_mode = #tpu.pipeline_mode<synchronous>, transform_indices = @transform_6, window_bounds = array<i64: 2, 8, 128>}, {pipeline_mode = #tpu.pipeline_mode<synchronous>, transform_indices = @transform_7, window_bounds = array<i64: 8, 128>}]} {
    %cst = arith.constant 0.000000e+00 : f32
    %0 = vector.broadcast %cst : f32 to vector<8x128xf32>
    %c0 = arith.constant 0 : index
    %c0_0 = arith.constant 0 : index
    %1 = vector.load %arg9[%c0, %c0_0] : memref<8x128xf32, #tpu.memory_space<vmem>>, vector<8x128xf32>
    tpu.vector_store %arg9[%c0, %c0_0], %0 {strides = array<i32>} : memref<8x128xf32, #tpu.memory_space<vmem>>, vector<8x128xf32>,
    %c0_1 = arith.constant 0 : index
    %c0_2 = arith.constant 0 : index
    %c0_3 = arith.constant 0 : index
    %2 = vector.load %arg1[%c0_1, %c0_2, %c0_3] : memref<2x4x16xf32, #tpu.memory_space<vmem>>, vector<1x4x16xf32>
    %3 = vector.shape_cast %2 : vector<1x4x16xf32> to vector<4x16xf32>
    %c0_4 = arith.constant 0 : index
    %c1 = arith.constant 1 : index
    %4 = vector.load %arg9[%c0_4, %c1] : memref<8x128xf32, #tpu.memory_space<vmem>>, vector<4x16xf32>
    tpu.vector_store %arg9[%c0_4, %c1], %3 {strides = array<i32>} : memref<8x128xf32, #tpu.memory_space<vmem>>, vector<4x16xf32>,
    %c1_5 = arith.constant 1 : index
    %c0_6 = arith.constant 0 : index
    %c0_7 = arith.constant 0 : index
    %5 = vector.load %arg1[%c1_5, %c0_6, %c0_7] : memref<2x4x16xf32, #tpu.memory_space<vmem>>, vector<1x4x16xf32>
    %6 = vector.shape_cast %5 : vector<1x4x16xf32> to vector<4x16xf32>
    %c0_8 = arith.constant 0 : index
    %c19 = arith.constant 19 : index
    %7 = vector.load %arg9[%c0_8, %c19] : memref<8x128xf32, #tpu.memory_space<vmem>>, vector<4x16xf32>
    tpu.vector_store %arg9[%c0_8, %c19], %6 {strides = array<i32>} : memref<8x128xf32, #tpu.memory_space<vmem>>, vector<4x16xf32>,
    %c0_9 = arith.constant 0 : index
    %c0_10 = arith.constant 0 : index
    %8 = vector.load %arg9[%c0_9, %c0_10] : memref<8x128xf32, #tpu.memory_space<vmem>>, vector<8x128xf32>
    %c0_11 = arith.constant 0 : index
    %c0_12 = arith.constant 0 : index
    %9 = vector.load %arg6[%c0_11, %c0_12] : memref<1x128xf32, #tpu.memory_space<vmem>>, vector<1x128xf32>
    %c1_i32 = arith.constant 1 : i32
    %10 = tpu.dynamic_rotate %8 by %c1_i32 dim 1 : vector<8x128xf32>, i32 -> vector<8x128xf32>
    %c0_i32 = arith.constant 0 : i32
    %11 = tpu.dynamic_rotate %8 by %c0_i32 dim 1 : vector<8x128xf32>, i32 -> vector<8x128xf32>
    %c127_i32 = arith.constant 127 : i32
    %12 = tpu.dynamic_rotate %8 by %c127_i32 dim 1 : vector<8x128xf32>, i32 -> vector<8x128xf32>
    %13 = tpu.concatenate %10, %11, %12 in 0 : vector<8x128xf32>, vector<8x128xf32>, vector<8x128xf32> -> vector<24x128xf32>
    %c0_13 = arith.constant 0 : index
    %c0_14 = arith.constant 0 : index
    %c0_15 = arith.constant 0 : index
    %14 = vector.load %arg2[%c0_13, %c0_14, %c0_15] : memref<2x8x24xf32, #tpu.memory_space<vmem>>, vector<1x8x24xf32>
    %15 = vector.shape_cast %14 : vector<1x8x24xf32> to vector<8x24xf32>
    %cst_16 = arith.constant dense<0.000000e+00> : vector<8x128xf32>
    %16 = tpu.matmul %15, %13, %cst_16 {dimension_numbers = #tpu.dot_dimension_numbers<[1], [0], [0], [1], [0, 0, 1, 1], [], []>} : vector<8x24xf32>, vector<24x128xf32>, vector<8x128xf32> -> vector<8x128xf32>
    %c0_17 = arith.constant 0 : index
    %c0_18 = arith.constant 0 : index
    %c0_19 = arith.constant 0 : index
    %17 = vector.load %arg3[%c0_17, %c0_18, %c0_19] : memref<2x8x1xf32, #tpu.memory_space<vmem>>, vector<1x8x1xf32>
    %18 = vector.shape_cast %17 : vector<1x8x1xf32> to vector<8x1xf32>
    %19 = vector.broadcast %18 : vector<8x1xf32> to vector<8x128xf32>
    %20 = arith.addf %16, %19 : vector<8x128xf32>
    %c0_20 = arith.constant 0 : index
    %c0_21 = arith.constant 0 : index
    %c0_22 = arith.constant 0 : index
    %21 = vector.load %arg7[%c0_20, %c0_21, %c0_22] : memref<2x8x128xf32, #tpu.memory_space<vmem>>, vector<1x8x128xf32>
    %22 = vector.shape_cast %21 : vector<1x8x128xf32> to vector<8x128xf32>
    %23 = vector.shape_cast %20 : vector<8x128xf32> to vector<1x8x128xf32>
    tpu.vector_store %arg7[%c0_20, %c0_21, %c0_22], %23 {strides = array<i32>} : memref<2x8x128xf32, #tpu.memory_space<vmem>>, vector<1x8x128xf32>,
    %24 = vector.broadcast %9 : vector<1x128xf32> to vector<8x128xf32>
    %25 = arith.mulf %20, %24 : vector<8x128xf32>
    %cst_23 = arith.constant dense<0.000000e+00> : vector<8xf32>
    %26 = vector.multi_reduction <add>, %25, %cst_23 [1] : vector<8x128xf32> to vector<8xf32>
    %27 = vector.shape_cast %26 : vector<8xf32> to vector<8x1xf32>
    %cst_24 = arith.constant 3.125000e-02 : f32
    %28 = vector.broadcast %cst_24 : f32 to vector<8x1xf32>
    %29 = arith.mulf %27, %28 : vector<8x1xf32>
    %30 = vector.broadcast %29 : vector<8x1xf32> to vector<8x128xf32>
    %31 = arith.subf %20, %30 : vector<8x128xf32>
    %32 = vector.broadcast %9 : vector<1x128xf32> to vector<8x128xf32>
    %33 = arith.mulf %31, %32 : vector<8x128xf32>
    %34 = arith.mulf %33, %33 : vector<8x128xf32>
    %cst_25 = arith.constant dense<0.000000e+00> : vector<8xf32>
    %35 = vector.multi_reduction <add>, %34, %cst_25 [1] : vector<8x128xf32> to vector<8xf32>
    %36 = vector.shape_cast %35 : vector<8xf32> to vector<8x1xf32>
    %cst_26 = arith.constant 3.125000e-02 : f32
    %37 = vector.broadcast %cst_26 : f32 to vector<8x1xf32>
    %38 = arith.mulf %36, %37 : vector<8x1xf32>
    %39 = vector.broadcast %29 : vector<8x1xf32> to vector<8x128xf32>
    %40 = arith.subf %20, %39 : vector<8x128xf32>
    %cst_27 = arith.constant 9.99999974E-6 : f32
    %41 = vector.broadcast %cst_27 : f32 to vector<8x1xf32>
    %42 = arith.addf %38, %41 : vector<8x1xf32>
    %43 = math.rsqrt %42 : vector<8x1xf32>
    %44 = vector.broadcast %43 : vector<8x1xf32> to vector<8x128xf32>
    %45 = arith.mulf %40, %44 : vector<8x128xf32>
    %c0_28 = arith.constant 0 : index
    %c0_29 = arith.constant 0 : index
    %c0_30 = arith.constant 0 : index
    %46 = vector.load %arg4[%c0_28, %c0_29, %c0_30] : memref<2x8x1xf32, #tpu.memory_space<vmem>>, vector<1x8x1xf32>
    %47 = vector.shape_cast %46 : vector<1x8x1xf32> to vector<8x1xf32>
    %48 = vector.broadcast %47 : vector<8x1xf32> to vector<8x128xf32>
    %49 = arith.mulf %48, %45 : vector<8x128xf32>
    %c0_31 = arith.constant 0 : index
    %c0_32 = arith.constant 0 : index
    %c0_33 = arith.constant 0 : index
    %50 = vector.load %arg5[%c0_31, %c0_32, %c0_33] : memref<2x8x1xf32, #tpu.memory_space<vmem>>, vector<1x8x1xf32>
    %51 = vector.shape_cast %50 : vector<1x8x1xf32> to vector<8x1xf32>
    %52 = vector.broadcast %51 : vector<8x1xf32> to vector<8x128xf32>
    %53 = arith.addf %49, %52 : vector<8x128xf32>
    %cst_34 = arith.constant 0.000000e+00 : f32
    %54 = vector.broadcast %cst_34 : f32 to vector<8x128xf32>
    %55 = arith.maximumf %53, %54 : vector<8x128xf32>
    %56 = vector.broadcast %9 : vector<1x128xf32> to vector<8x128xf32>
    %57 = arith.mulf %55, %56 : vector<8x128xf32>
    %c1_i32_35 = arith.constant 1 : i32
    %58 = tpu.dynamic_rotate %57 by %c1_i32_35 dim 1 : vector<8x128xf32>, i32 -> vector<8x128xf32>
    %c0_i32_36 = arith.constant 0 : i32
    %59 = tpu.dynamic_rotate %57 by %c0_i32_36 dim 1 : vector<8x128xf32>, i32 -> vector<8x128xf32>
    %c127_i32_37 = arith.constant 127 : i32
    %60 = tpu.dynamic_rotate %57 by %c127_i32_37 dim 1 : vector<8x128xf32>, i32 -> vector<8x128xf32>
    %61 = tpu.concatenate %58, %59, %60 in 0 : vector<8x128xf32>, vector<8x128xf32>, vector<8x128xf32> -> vector<24x128xf32>
    %c1_38 = arith.constant 1 : index
    %c0_39 = arith.constant 0 : index
    %c0_40 = arith.constant 0 : index
    %62 = vector.load %arg2[%c1_38, %c0_39, %c0_40] : memref<2x8x24xf32, #tpu.memory_space<vmem>>, vector<1x8x24xf32>
    %63 = vector.shape_cast %62 : vector<1x8x24xf32> to vector<8x24xf32>
    %cst_41 = arith.constant dense<0.000000e+00> : vector<8x128xf32>
    %64 = tpu.matmul %63, %61, %cst_41 {dimension_numbers = #tpu.dot_dimension_numbers<[1], [0], [0], [1], [0, 0, 1, 1], [], []>} : vector<8x24xf32>, vector<24x128xf32>, vector<8x128xf32> -> vector<8x128xf32>
    %c1_42 = arith.constant 1 : index
    %c0_43 = arith.constant 0 : index
    %c0_44 = arith.constant 0 : index
    %65 = vector.load %arg3[%c1_42, %c0_43, %c0_44] : memref<2x8x1xf32, #tpu.memory_space<vmem>>, vector<1x8x1xf32>
    %66 = vector.shape_cast %65 : vector<1x8x1xf32> to vector<8x1xf32>
    %67 = vector.broadcast %66 : vector<8x1xf32> to vector<8x128xf32>
    %68 = arith.addf %64, %67 : vector<8x128xf32>
    %c1_45 = arith.constant 1 : index
    %c0_46 = arith.constant 0 : index
    %c0_47 = arith.constant 0 : index
    %69 = vector.load %arg7[%c1_45, %c0_46, %c0_47] : memref<2x8x128xf32, #tpu.memory_space<vmem>>, vector<1x8x128xf32>
    %70 = vector.shape_cast %69 : vector<1x8x128xf32> to vector<8x128xf32>
    %71 = vector.shape_cast %68 : vector<8x128xf32> to vector<1x8x128xf32>
    tpu.vector_store %arg7[%c1_45, %c0_46, %c0_47], %71 {strides = array<i32>} : memref<2x8x128xf32, #tpu.memory_space<vmem>>, vector<1x8x128xf32>,
    %72 = vector.broadcast %9 : vector<1x128xf32> to vector<8x128xf32>
    %73 = arith.mulf %68, %72 : vector<8x128xf32>
    %cst_48 = arith.constant dense<0.000000e+00> : vector<8xf32>
    %74 = vector.multi_reduction <add>, %73, %cst_48 [1] : vector<8x128xf32> to vector<8xf32>
    %75 = vector.shape_cast %74 : vector<8xf32> to vector<8x1xf32>
    %cst_49 = arith.constant 3.125000e-02 : f32
    %76 = vector.broadcast %cst_49 : f32 to vector<8x1xf32>
    %77 = arith.mulf %75, %76 : vector<8x1xf32>
    %78 = vector.broadcast %77 : vector<8x1xf32> to vector<8x128xf32>
    %79 = arith.subf %68, %78 : vector<8x128xf32>
    %80 = vector.broadcast %9 : vector<1x128xf32> to vector<8x128xf32>
    %81 = arith.mulf %79, %80 : vector<8x128xf32>
    %82 = arith.mulf %81, %81 : vector<8x128xf32>
    %cst_50 = arith.constant dense<0.000000e+00> : vector<8xf32>
    %83 = vector.multi_reduction <add>, %82, %cst_50 [1] : vector<8x128xf32> to vector<8xf32>
    %84 = vector.shape_cast %83 : vector<8xf32> to vector<8x1xf32>
    %cst_51 = arith.constant 3.125000e-02 : f32
    %85 = vector.broadcast %cst_51 : f32 to vector<8x1xf32>
    %86 = arith.mulf %84, %85 : vector<8x1xf32>
    %87 = vector.broadcast %77 : vector<8x1xf32> to vector<8x128xf32>
    %88 = arith.subf %68, %87 : vector<8x128xf32>
    %cst_52 = arith.constant 9.99999974E-6 : f32
    %89 = vector.broadcast %cst_52 : f32 to vector<8x1xf32>
    %90 = arith.addf %86, %89 : vector<8x1xf32>
    %91 = math.rsqrt %90 : vector<8x1xf32>
    %92 = vector.broadcast %91 : vector<8x1xf32> to vector<8x128xf32>
    %93 = arith.mulf %88, %92 : vector<8x128xf32>
    %c1_53 = arith.constant 1 : index
    %c0_54 = arith.constant 0 : index
    %c0_55 = arith.constant 0 : index
    %94 = vector.load %arg4[%c1_53, %c0_54, %c0_55] : memref<2x8x1xf32, #tpu.memory_space<vmem>>, vector<1x8x1xf32>
    %95 = vector.shape_cast %94 : vector<1x8x1xf32> to vector<8x1xf32>
    %96 = vector.broadcast %95 : vector<8x1xf32> to vector<8x128xf32>
    %97 = arith.mulf %96, %93 : vector<8x128xf32>
    %c1_56 = arith.constant 1 : index
    %c0_57 = arith.constant 0 : index
    %c0_58 = arith.constant 0 : index
    %98 = vector.load %arg5[%c1_56, %c0_57, %c0_58] : memref<2x8x1xf32, #tpu.memory_space<vmem>>, vector<1x8x1xf32>
    %99 = vector.shape_cast %98 : vector<1x8x1xf32> to vector<8x1xf32>
    %100 = vector.broadcast %99 : vector<8x1xf32> to vector<8x128xf32>
    %101 = arith.addf %97, %100 : vector<8x128xf32>
    %cst_59 = arith.constant 0.000000e+00 : f32
    %102 = vector.broadcast %cst_59 : f32 to vector<8x128xf32>
    %103 = arith.maximumf %101, %102 : vector<8x128xf32>
    %104 = vector.broadcast %9 : vector<1x128xf32> to vector<8x128xf32>
    %105 = arith.mulf %103, %104 : vector<8x128xf32>
    %c0_60 = arith.constant 0 : index
    %c0_61 = arith.constant 0 : index
    %106 = vector.load %arg8[%c0_60, %c0_61] : memref<8x128xf32, #tpu.memory_space<vmem>>, vector<8x128xf32>
    tpu.vector_store %arg8[%c0_60, %c0_61], %105 {strides = array<i32>} : memref<8x128xf32, #tpu.memory_space<vmem>>, vector<8x128xf32>,
    return
  }
  func.func @transform_0(%arg0: i32) -> (i32, i32, i32) {
    %c0_i32 = arith.constant 0 : i32
    %c0_i32_0 = arith.constant 0 : i32
    %c0_i32_1 = arith.constant 0 : i32
    %c0_i32_2 = arith.constant 0 : i32
    return %c0_i32, %c0_i32_0, %c0_i32_1 : i32, i32, i32
  }
  func.func @transform_1(%arg0: i32) -> (i32, i32, i32) {
    %c0_i32 = arith.constant 0 : i32
    %c0_i32_0 = arith.constant 0 : i32
    %c0_i32_1 = arith.constant 0 : i32
    %c0_i32_2 = arith.constant 0 : i32
    return %c0_i32, %c0_i32_0, %c0_i32_1 : i32, i32, i32
  }
  func.func @transform_2(%arg0: i32) -> (i32, i32, i32) {
    %c0_i32 = arith.constant 0 : i32
    %c0_i32_0 = arith.constant 0 : i32
    %c0_i32_1 = arith.constant 0 : i32
    %c0_i32_2 = arith.constant 0 : i32
    return %c0_i32, %c0_i32_0, %c0_i32_1 : i32, i32, i32
  }
  func.func @transform_3(%arg0: i32) -> (i32, i32, i32) {
    %c0_i32 = arith.constant 0 : i32
    %c0_i32_0 = arith.constant 0 : i32
    %c0_i32_1 = arith.constant 0 : i32
    %c0_i32_2 = arith.constant 0 : i32
    return %c0_i32, %c0_i32_0, %c0_i32_1 : i32, i32, i32
  }
  func.func @transform_4(%arg0: i32) -> (i32, i32, i32) {
    %c0_i32 = arith.constant 0 : i32
    %c0_i32_0 = arith.constant 0 : i32
    %c0_i32_1 = arith.constant 0 : i32
    %c0_i32_2 = arith.constant 0 : i32
    return %c0_i32, %c0_i32_0, %c0_i32_1 : i32, i32, i32
  }
  func.func @transform_5(%arg0: i32) -> (i32, i32) {
    %c0_i32 = arith.constant 0 : i32
    %c0_i32_0 = arith.constant 0 : i32
    %c0_i32_1 = arith.constant 0 : i32
    return %c0_i32, %c0_i32_0 : i32, i32
  }
  func.func @transform_6(%arg0: i32) -> (i32, i32, i32) {
    %c0_i32 = arith.constant 0 : i32
    %c0_i32_0 = arith.constant 0 : i32
    %c0_i32_1 = arith.constant 0 : i32
    %c0_i32_2 = arith.constant 0 : i32
    return %c0_i32, %c0_i32_0, %c0_i32_1 : i32, i32, i32
  }
  func.func @transform_7(%arg0: i32) -> (i32, i32) {
    %c0_i32 = arith.constant 0 : i32
    %c0_i32_0 = arith.constant 0 : i32
    %c0_i32_1 = arith.constant 0 : i32
    return %c0_i32, %c0_i32_0 : i32, i32
  }
}

</mosaic_0001>

<llo_original>
// kernel: cnn_block_forward.1
$region0: #{cnn_block_forward.1}
  #allocation0 [shape = 'u32[]', space=smem, size = 0x4, offset = 0x4, fixed_abs, tag = 'smem constant byte address 0x4 - core index']
  #allocation1 [shape = 'u32[144,128]{1,0:T(1,128)}', space=vmem, size = 0x12000, scoped, tag = 'internal scratch']
  #allocation2 [shape = 'f32[8,128]{1,0:T(8,128)}', space=vmem, size = 0x1000, scoped, tag = 'scratch operand']
  %s0 = inlined_call_operand.vmem [shape: f32[2,4,16], index: 0, kind: input, shape index: {}]
  %s1 = inlined_call_operand.vmem [shape: f32[2,8,24], index: 1, kind: input, shape index: {}]
  %s2 = inlined_call_operand.vmem [shape: f32[2,8,1], index: 2, kind: input, shape index: {}]
  %s3 = inlined_call_operand.vmem [shape: f32[2,8,1], index: 3, kind: input, shape index: {}]
  %s4 = inlined_call_operand.vmem [shape: f32[2,8,1], index: 4, kind: input, shape index: {}]
  %s5 = inlined_call_operand.vmem [shape: f32[1,128], index: 5, kind: input, shape index: {}]
  %s6 = inlined_call_operand.vmem [shape: f32[2,8,128], index: 6, kind: output, shape index: {0}]
  %s7 = inlined_call_operand.vmem [shape: f32[8,128], index: 7, kind: output, shape index: {1}]
  %8 = xla_tuple %s6, %s7
  %s9 = sld [smem:[#allocation0]]
  $region42: #{cnn_block_forward.1} parent=0
    _
  %s11 = ssub.s32 1, %s9
  %s12 = scalar_select 0, %s11, %s9
  // Predicated region
  $region2: #{cnn_block_forward.1} parent=0 // pred_check
    _
  $region3: #{cnn_block_forward.1} parent=0 // pred_check_branch
    %14 = sbr.rel (0) target = $region5
  $region4: #{cnn_block_forward.1} parent=0 // pred_region
    _
  $region5: #{cnn_block_forward.1} parent=0 // pred_fallthru
    _
  // Predicated region
  $region6: #{cnn_block_forward.1} parent=0 // pred_check
    _
  $region7: #{cnn_block_forward.1} parent=0 // pred_check_branch
    %16 = sbr.rel (0) target = $region9
  $region8: #{cnn_block_forward.1} parent=0 // pred_region
    _
  $region9: #{cnn_block_forward.1} parent=0 // pred_fallthru
    _
  // Predicated region
  $region10: #{cnn_block_forward.1} parent=0 // pred_check
    _
  $region11: #{cnn_block_forward.1} parent=0 // pred_check_branch
    %18 = sbr.rel (0) target = $region13
  $region12: #{cnn_block_forward.1} parent=0 // pred_region
    _
  $region13: #{cnn_block_forward.1} parent=0 // pred_fallthru
    _
  // Predicated region
  $region14: #{cnn_block_forward.1} parent=0 // pred_check
    _
  $region15: #{cnn_block_forward.1} parent=0 // pred_check_branch
    %20 = sbr.rel (0) target = $region17
  $region16: #{cnn_block_forward.1} parent=0 // pred_region
    _
  $region17: #{cnn_block_forward.1} parent=0 // pred_fallthru
    _
  // Predicated region
  $region18: #{cnn_block_forward.1} parent=0 // pred_check
    _
  $region19: #{cnn_block_forward.1} parent=0 // pred_check_branch
    %22 = sbr.rel (0) target = $region21
  $region20: #{cnn_block_forward.1} parent=0 // pred_region
    _
  $region21: #{cnn_block_forward.1} parent=0 // pred_fallthru
    _
  // Predicated region
  $region22: #{cnn_block_forward.1} parent=0 // pred_check
    _
  $region23: #{cnn_block_forward.1} parent=0 // pred_check_branch
    %24 = sbr.rel (0) target = $region25
  $region24: #{cnn_block_forward.1} parent=0 // pred_region
    _
  $region25: #{cnn_block_forward.1} parent=0 // pred_fallthru
    _
  %25 = vst [vmem:[#allocation2] sm:$0xff] 0.0
  %v26 = vld [vmem:[%s0] sm:$0xf]
  %28 = vrot.lane.b32.xlu0 %v26, 1
  %v29 = vpop.permute.xlu0 %28
  %vm31 = vcmask 134152
  %32 = vst.msk [vmem:[#allocation2] sm:$0xf] %vm31, %v29
  %s33 = scalar_lea.vmem %s0, 4
  %v34 = vld [vmem:[%s33] sm:$0xf]
  %36 = vrot.lane.b32.xlu0 %v34, 19
  %v37 = vpop.permute.xlu0 %36
  %vm39 = vcmask 281752
  %40 = vst.msk [vmem:[#allocation2] sm:$0xf] %vm39, %v37
  %v41 = vld [vmem:[#allocation2] sm:$0xff]
  %v42 = vld [vmem:[%s5] sm:$0x1]
  %43 = vrot.lane.b32.xlu0 %v41, 1
  %v44 = vpop.permute.xlu0 %43
  %45 = vrot.lane.b32.xlu0 %v41, 127
  %v46 = vpop.permute.xlu0 %45
  %v47 = vld [vmem:[%s1] sm:$0xff]
  %v48 = vld [vmem:[%s2] sm:$0xff]
  %50 = vset.pattern.permute.xlu0 0
  %51 = vperm.xlu0 %50, %v48
  %v52 = vpop.permute.xlu0 %51
  %vm54 = vcmask 195584
  %v56 = vsel %vm54, %v47, 0
  %58 = vmatprep.subr.mxu0 0.0
  %59 = vmatpush1.msra.mxu0 %v44
  %60 = vmatprep.subr.mxu0 0.0
  %61 = vmatpush1.msra.mxu0 %v41
  %62 = vmatprep.subr.mxu0 0.0
  %63 = vmatpush1.msra.mxu0 %v46
  %64 = vmatprep.subr.mxu0 0.0
  %65 = vmatpush1.msra.mxu0 0.0
  %66 = vmatprep.subr.mxu0 0.0
  %67 = vmatpush1.msra.mxu0 0.0
  %68 = vmatprep.subr.mxu0 0.0
  %69 = vmatpush1.msra.mxu0 0.0
  %70 = vmatprep.subr.mxu0 0.0
  %71 = vmatpush1.msra.mxu0 0.0
  %72 = vmatprep.subr.mxu0 0.0
  %73 = vmatpush1.msra.mxu0 0.0
  %74 = vmatprep.subr.mxu0 0.0
  %75 = vmatpush1.msra.mxu0 0.0
  %76 = vmatprep.subr.mxu0 0.0
  %77 = vmatpush1.msra.mxu0 0.0
  %78 = vmatprep.subr.mxu0 0.0
  %79 = vmatpush1.msra.mxu0 0.0
  %80 = vmatprep.subr.mxu0 0.0
  %81 = vmatpush1.msra.mxu0 0.0
  %82 = vmatprep.subr.mxu0 0.0
  %83 = vmatpush1.msra.mxu0 0.0
  %84 = vmatprep.subr.mxu0 0.0
  %85 = vmatpush1.msra.mxu0 0.0
  %86 = vmatprep.subr.mxu0 0.0
  %87 = vmatpush1.msra.mxu0 0.0
  %88 = vmatprep.subr.mxu0 0.0
  %89 = vmatpush1.msra.mxu0 0.0
  %90 = vmatprep.subr.mxu0 0.0
  %91 = vmatpush1.msra.mxu0 0.0
  %92 = vmatprep.subr.mxu0 0.0
  %93 = vmatpush1.msra.mxu0 0.0
  %94 = vmatprep.subr.mxu0 0.0
  %95 = vmatpush1.msra.mxu0 0.0
  %96 = vmatprep.subr.mxu0 0.0
  %97 = vmatpush1.msra.mxu0 0.0
  %98 = vmatprep.subr.mxu0 0.0
  %99 = vmatpush1.msra.mxu0 0.0
  %100 = vmatprep.subr.mxu0 0.0
  %101 = vmatpush1.msra.mxu0 0.0
  %102 = vmatprep.subr.mxu0 0.0
  %103 = vmatpush1.msra.mxu0 0.0
  %104 = vmatprep.subr.mxu0 0.0
  %105 = vmatpush1.msra.mxu0 0.0
  %106 = vmatprep.subr.mxu0 0.0
  %107 = vmatpush1.msra.mxu0 0.0
  %108 = vmatprep.subr.mxu0 0.0
  %109 = vmatpush1.msra.mxu0 0.0
  %110 = vmatprep.subr.mxu0 0.0
  %111 = vmatpush1.msra.mxu0 0.0
  %112 = vmatprep.subr.mxu0 0.0
  %113 = vmatpush1.msra.mxu0 0.0
  %114 = vmatprep.subr.mxu0 0.0
  %115 = vmatpush1.msra.mxu0 0.0
  %116 = vmatprep.subr.mxu0 0.0
  %117 = vmatpush1.msra.mxu0 0.0
  %118 = vmatprep.subr.mxu0 0.0
  %119 = vmatpush1.msra.mxu0 0.0
  %120 = vmatprep.subr.mxu0 0.0
  %121 = vmatpush1.msra.mxu0 0.0
  %122 = vmatprep.mubr.f32.mxu0 0.0
  %123 = vmatmul.mubr.f32.gmra.mrb[0].mxu0 %v56
  %v124 = vpop.f32.mrb[0].mxu0
  %v125 = vadd.f32 %v52, %v124
  %v126 = vpop.f32.mrb[0].mxu0
  %127 = vdwg.mxu0
  %128 = vst [vmem:[%s6] sm:$0xff] %v125
  %v130 = vlaneseq
  %v131 = vshrl.u32 %v130, 7
  %v132 = vsub.s32 0, %v131
  %v133 = vrot.slane %v42, %v132
  %v135 = vmul.f32 %v125, %v133
  %136 = vadd.xlane.f32.xlu0 %v135
  %v137 = vpop.xlane.xlu0 %136
  %v138 = vmul.f32 %v137, 0.03125
  %v139 = vsub.f32 %v125, %v138
  %v140 = vmul.f32 %v139, %v133
  %v141 = vmul.f32 %v140, %v140
  %142 = vadd.xlane.f32.xlu0 %v141
  %v143 = vpop.xlane.xlu0 %142
  %v144 = vmul.f32 %v143, 0.03125
  %v145 = vadd.f32 %v144, 1e-05
  %v146 = vrsqrt.pop %v145
  %v147 = vmul.f32 %v139, %v146
  %v148 = vld [vmem:[%s3] sm:$0xff]
  %150 = vset.pattern.permute.xlu0 0
  %151 = vperm.xlu0 %150, %v148
  %v152 = vpop.permute.xlu0 %151
  %v154 = vmul.f32 %v152, %v147
  %v155 = vld [vmem:[%s4] sm:$0xff]
  %157 = vset.pattern.permute.xlu0 0
  %158 = vperm.xlu0 %157, %v155
  %v159 = vpop.permute.xlu0 %158
  %v161 = vadd.f32 %v154, %v159
  %v162 = vmax.f32 %v161, 0.0
  %v163 = vmul.f32 %v162, %v133
  %164 = vrot.lane.b32.xlu0 %v163, 1
  %v165 = vpop.permute.xlu0 %164
  %166 = vrot.lane.b32.xlu0 %v163, 127
  %v167 = vpop.permute.xlu0 %166
  %s168 = scalar_lea.vmem %s1, 8
  %v169 = vld [vmem:[%s168] sm:$0xff]
  %s170 = scalar_lea.vmem %s2, 8
  %v171 = vld [vmem:[%s170] sm:$0xff]
  %173 = vset.pattern.permute.xlu0 0
  %174 = vperm.xlu0 %173, %v171
  %v175 = vpop.permute.xlu0 %174
  %v178 = vsel %vm54, %v169, 0
  %180 = vmatprep.subr.mxu0 0.0
  %181 = vmatpush1.msra.mxu0 %v165
  %182 = vmatprep.subr.mxu0 0.0
  %183 = vmatpush1.msra.mxu0 %v163
  %184 = vmatprep.subr.mxu0 0.0
  %185 = vmatpush1.msra.mxu0 %v167
  %186 = vmatprep.subr.mxu0 0.0
  %187 = vmatpush1.msra.mxu0 0.0
  %188 = vmatprep.subr.mxu0 0.0
  %189 = vmatpush1.msra.mxu0 0.0
  %190 = vmatprep.subr.mxu0 0.0
  %191 = vmatpush1.msra.mxu0 0.0
  %192 = vmatprep.subr.mxu0 0.0
  %193 = vmatpush1.msra.mxu0 0.0
  %194 = vmatprep.subr.mxu0 0.0
  %195 = vmatpush1.msra.mxu0 0.0
  %196 = vmatprep.subr.mxu0 0.0
  %197 = vmatpush1.msra.mxu0 0.0
  %198 = vmatprep.subr.mxu0 0.0
  %199 = vmatpush1.msra.mxu0 0.0
  %200 = vmatprep.subr.mxu0 0.0
  %201 = vmatpush1.msra.mxu0 0.0
  %202 = vmatprep.subr.mxu0 0.0
  %203 = vmatpush1.msra.mxu0 0.0
  %204 = vmatprep.subr.mxu0 0.0
  %205 = vmatpush1.msra.mxu0 0.0
  %206 = vmatprep.subr.mxu0 0.0
  %207 = vmatpush1.msra.mxu0 0.0
  %208 = vmatprep.subr.mxu0 0.0
  %209 = vmatpush1.msra.mxu0 0.0
  %210 = vmatprep.subr.mxu0 0.0
  %211 = vmatpush1.msra.mxu0 0.0
  %212 = vmatprep.subr.mxu0 0.0
  %213 = vmatpush1.msra.mxu0 0.0
  %214 = vmatprep.subr.mxu0 0.0
  %215 = vmatpush1.msra.mxu0 0.0
  %216 = vmatprep.subr.mxu0 0.0
  %217 = vmatpush1.msra.mxu0 0.0
  %218 = vmatprep.subr.mxu0 0.0
  %219 = vmatpush1.msra.mxu0 0.0
  %220 = vmatprep.subr.mxu0 0.0
  %221 = vmatpush1.msra.mxu0 0.0
  %222 = vmatprep.subr.mxu0 0.0
  %223 = vmatpush1.msra.mxu0 0.0
  %224 = vmatprep.subr.mxu0 0.0
  %225 = vmatpush1.msra.mxu0 0.0
  %226 = vmatprep.subr.mxu0 0.0
  %227 = vmatpush1.msra.mxu0 0.0
  %228 = vmatprep.subr.mxu0 0.0
  %229 = vmatpush1.msra.mxu0 0.0
  %230 = vmatprep.subr.mxu0 0.0
  %231 = vmatpush1.msra.mxu0 0.0
  %232 = vmatprep.subr.mxu0 0.0
  %233 = vmatpush1.msra.mxu0 0.0
  %234 = vmatprep.subr.mxu0 0.0
  %235 = vmatpush1.msra.mxu0 0.0
  %236 = vmatprep.subr.mxu0 0.0
  %237 = vmatpush1.msra.mxu0 0.0
  %238 = vmatprep.subr.mxu0 0.0
  %239 = vmatpush1.msra.mxu0 0.0
  %240 = vmatprep.subr.mxu0 0.0
  %241 = vmatpush1.msra.mxu0 0.0
  %242 = vmatprep.subr.mxu0 0.0
  %243 = vmatpush1.msra.mxu0 0.0
  %244 = vmatprep.mubr.f32.mxu0 0.0
  %245 = vmatmul.mubr.f32.gmra.mrb[0].mxu0 %v178
  %v246 = vpop.f32.mrb[0].mxu0
  %v247 = vadd.f32 %v175, %v246
  %v248 = vpop.f32.mrb[0].mxu0
  %249 = vdwg.mxu0
  %s250 = scalar_lea.vmem %s6, 8
  %251 = vst [vmem:[%s250] sm:$0xff] %v247
  %v252 = vmul.f32 %v247, %v133
  %253 = vadd.xlane.f32.xlu0 %v252
  %v254 = vpop.xlane.xlu0 %253
  %v255 = vmul.f32 %v254, 0.03125
  %v256 = vsub.f32 %v247, %v255
  %v257 = vmul.f32 %v256, %v133
  %v258 = vmul.f32 %v257, %v257
  %259 = vadd.xlane.f32.xlu0 %v258
  %v260 = vpop.xlane.xlu0 %259
  %v261 = vmul.f32 %v260, 0.03125
  %v262 = vadd.f32 %v261, 1e-05
  %v263 = vrsqrt.pop %v262
  %v264 = vmul.f32 %v256, %v263
  %s265 = scalar_lea.vmem %s3, 8
  %v266 = vld [vmem:[%s265] sm:$0xff]
  %268 = vset.pattern.permute.xlu0 0
  %269 = vperm.xlu0 %268, %v266
  %v270 = vpop.permute.xlu0 %269
  %v272 = vmul.f32 %v270, %v264
  %s273 = scalar_lea.vmem %s4, 8
  %v274 = vld [vmem:[%s273] sm:$0xff]
  %276 = vset.pattern.permute.xlu0 0
  %277 = vperm.xlu0 %276, %v274
  %v278 = vpop.permute.xlu0 %277
  %v280 = vadd.f32 %v272, %v278
  %v281 = vmax.f32 %v280, 0.0
  %v282 = vmul.f32 %v281, %v133
  %283 = vst [vmem:[%s7] sm:$0xff] %v282
  // Predicated region
  $region26: #{cnn_block_forward.1} parent=0 // pred_check
    _
  $region27: #{cnn_block_forward.1} parent=0 // pred_check_branch
    %285 = sbr.rel (0) target = $region29
  $region28: #{cnn_block_forward.1} parent=0 // pred_region
    _
  $region29: #{cnn_block_forward.1} parent=0 // pred_fallthru
    _
  // Predicated region
  $region30: #{cnn_block_forward.1} parent=0 // pred_check
    _
  $region31: #{cnn_block_forward.1} parent=0 // pred_check_branch
    %287 = sbr.rel (0) target = $region33
  $region32: #{cnn_block_forward.1} parent=0 // pred_region
    _
  $region33: #{cnn_block_forward.1} parent=0 // pred_fallthru
    _
  // Predicated region
  $region34: #{cnn_block_forward.1} parent=0 // pred_check
    _
  $region35: #{cnn_block_forward.1} parent=0 // pred_check_branch
    %289 = sbr.rel (0) target = $region37
  $region36: #{cnn_block_forward.1} parent=0 // pred_region
    _
  $region37: #{cnn_block_forward.1} parent=0 // pred_fallthru
    _
  // Predicated region
  $region38: #{cnn_block_forward.1} parent=0 // pred_check
    _
  $region39: #{cnn_block_forward.1} parent=0 // pred_check_branch
    %291 = sbr.rel (0) target = $region41
  $region40: #{cnn_block_forward.1} parent=0 // pred_region
    _
  $region41: #{cnn_block_forward.1} parent=0 // pred_fallthru
    _

</llo_original>
